<compile_context>
chip_gen: v5e
topology: v5e:2x2
jax: 0.10.0
libtpu: 0.0.40
codegen_flags: <defaults>
</compile_context>

<pallas_src>
import jax
import jax.numpy as jnp
from jax.experimental import pallas as pl
from jax.experimental.pallas import tpu as pltpu

LANE = 1024            # lane-dense width (multiple of 128)
MAX_BLOCK_ROWS = 512   # (512, 1024) f32 = 2 MiB/buffer; in+out, double-buffered = 8 MiB


def _round_up(x, m):
    return ((x + m - 1) // m) * m


def logreg_kernel(wb_ref, x_ref, o_ref):
    # wb_ref: (2,) f32 in SMEM holding [w/2, b/2]; x_ref/o_ref: (block_rows, LANE) VMEM.
    half_w = wb_ref[0]
    half_b = wb_ref[1]
    # sigmoid(z) = 0.5*tanh(z/2) + 0.5 with z/2 = x*(w/2) + (b/2):
    # 4 VALU ops + 1 EUP tanh per vreg, numerically robust for large |z|.
    t = jnp.tanh(x_ref[...] * half_w + half_b)
    o_ref[...] = 0.5 * t + 0.5


def logistic_regression_forward(x, w, b):
    """x: (N, 1) f32, w: (1, 1) f32, b: (1,) f32  ->  (N, 1) f32 = sigmoid(x @ W^T + b)."""
    n = x.shape[0]
    dtype = x.dtype

    # Lane-dense view of the batch dimension. Pad only to LANE granularity and
    # skip the pad entirely when already aligned (free metadata reshape).
    x_flat = x.reshape(-1)
    padded_n = _round_up(n, LANE)
    if padded_n != n:
        x_flat = jnp.pad(x_flat, (0, padded_n - n))
    rows = padded_n // LANE
    x2d = x_flat.reshape(rows, LANE)

    # Tile selection: big tiles for HBM-streaming efficiency, but keep >= ~4 grid
    # steps so "parallel" can spread row-tiles across v7x's two TensorCores.
    if rows <= 8:
        block_rows = rows                      # single (full-array) block
    else:
        block_rows = min(MAX_BLOCK_ROWS, _round_up(pl.cdiv(rows, 4), 8))
    grid = (pl.cdiv(rows, block_rows),)        # ragged last block handled by Pallas

    # Fold the sigmoid half-scale into the scalars (saves one VALU mul per vreg).
    wb = jnp.concatenate(
        [(0.5 * w).reshape(1), (0.5 * b).reshape(1)]).astype(jnp.float32)  # (2,)

    out2d = pl.pallas_call(
        logreg_kernel,
        out_shape=jax.ShapeDtypeStruct((rows, LANE), dtype),
        grid=grid,
        in_specs=[
            pl.BlockSpec(memory_space=pltpu.MemorySpace.SMEM),       # [w/2, b/2] scalars
            pl.BlockSpec((block_rows, LANE), lambda i: (i, 0)),      # x row-tile (lane-dense)
        ],
        out_specs=pl.BlockSpec((block_rows, LANE), lambda i: (i, 0)),
        compiler_params=pltpu.CompilerParams(
            dimension_semantics=("parallel",),                       # megacore / v7x 2-TC
        ),
    )(wb, x2d)

    # Restore PyTorch's (N, 1) layout (slice off lane padding only when present).
    out_flat = out2d.reshape(-1)
    if padded_n != n:
        out_flat = out_flat[:n]
    return out_flat.reshape(n, 1)


if __name__ == "__main__":
    key = jax.random.PRNGKey(0)
    kw, kb, kx = jax.random.split(key, 3)

    # Deterministic nn.Linear(1, 1) parameters.
    w = jax.random.uniform(kw, (1, 1), jnp.float32, minval=-1.0, maxval=1.0)
    b = jax.random.uniform(kb, (1,), jnp.float32, minval=-1.0, maxval=1.0)

    # 1) The module's own input: np.linspace(0, 10, 200), reshaped for nn.Linear.
    n_small = 200
    x_small = jnp.linspace(0.0, 10.0, n_small, dtype=jnp.float32).reshape(n_small, 1)
    y_small = jax.block_until_ready(logistic_regression_forward(x_small, w, b))
    y_small_ref = jax.nn.sigmoid(x_small @ w.T + b)
    assert y_small.shape == (n_small, 1)
    assert jnp.allclose(y_small, y_small_ref, atol=1e-5, rtol=1e-5)

    # 2) Non-lane-aligned N with multiple grid steps and a ragged last row-block
    #    (rows = 41 -> block_rows = 16 -> grid = 3, last block partial).
    n_big = 41 * LANE - 941
    x_big = jax.random.normal(kx, (n_big, 1), jnp.float32) * 4.0
    y_big = jax.block_until_ready(logistic_regression_forward(x_big, w, b))
    y_big_ref = jax.nn.sigmoid(x_big @ w.T + b)
    assert y_big.shape == (n_big, 1)
    assert jnp.allclose(y_big, y_big_ref, atol=1e-5, rtol=1e-5)

    print("KERNEL_OK")
</pallas_src>

<mosaic_0001>
module attributes {stable_mosaic.version = 11 : i64} {
  func.func @logreg_kernel(%arg0: i32, %arg1: memref<2xf32, #tpu.memory_space<smem>>, %arg2: memref<1x1024xf32, #tpu.memory_space<vmem>>, %arg3: memref<1x1024xf32, #tpu.memory_space<vmem>>) attributes {dimension_semantics = [#tpu.dimension_semantics<parallel>], iteration_bounds = array<i64: 1>, scalar_prefetch = 0 : i64, scratch_operands = 0 : i64, tpu.core_type = #tpu.core_type<tc>, window_params = [{transform_indices = @transform_0, window_bounds = array<i64: 2>}, {transform_indices = @transform_1, window_bounds = array<i64: 1, 1024>}, {transform_indices = @transform_2, window_bounds = array<i64: 1, 1024>}]} {
    %c0 = arith.constant 0 : index
    %0 = memref.load %arg1[%c0] : memref<2xf32, #tpu.memory_space<smem>>
    %c1 = arith.constant 1 : index
    %1 = memref.load %arg1[%c1] : memref<2xf32, #tpu.memory_space<smem>>
    %c0_0 = arith.constant 0 : index
    %c0_1 = arith.constant 0 : index
    %2 = vector.load %arg2[%c0_0, %c0_1] : memref<1x1024xf32, #tpu.memory_space<vmem>>, vector<1x1024xf32>
    %3 = vector.broadcast %0 : f32 to vector<1x1024xf32>
    %4 = arith.mulf %2, %3 : vector<1x1024xf32>
    %5 = vector.broadcast %1 : f32 to vector<1x1024xf32>
    %6 = arith.addf %4, %5 : vector<1x1024xf32>
    %7 = math.tanh %6 : vector<1x1024xf32>
    %cst = arith.constant 5.000000e-01 : f32
    %8 = vector.broadcast %cst : f32 to vector<1x1024xf32>
    %9 = arith.mulf %8, %7 : vector<1x1024xf32>
    %cst_2 = arith.constant 5.000000e-01 : f32
    %10 = vector.broadcast %cst_2 : f32 to vector<1x1024xf32>
    %11 = arith.addf %9, %10 : vector<1x1024xf32>
    %c0_3 = arith.constant 0 : index
    %c0_4 = arith.constant 0 : index
    %12 = vector.load %arg3[%c0_3, %c0_4] : memref<1x1024xf32, #tpu.memory_space<vmem>>, vector<1x1024xf32>
    tpu.vector_store %arg3[%c0_3, %c0_4], %11 {strides = array<i32>} : memref<1x1024xf32, #tpu.memory_space<vmem>>, vector<1x1024xf32>,
    return
  }
  func.func @transform_0(%arg0: i32) -> i32 {
    %c0_i32 = arith.constant 0 : i32
    %c0_i32_0 = arith.constant 0 : i32
    return %c0_i32 : i32
  }
  func.func @transform_1(%arg0: i32) -> (i32, i32) {
    %c0_i32 = arith.constant 0 : i32
    %c0_i32_0 = arith.constant 0 : i32
    return %arg0, %c0_i32 : i32, i32
  }
  func.func @transform_2(%arg0: i32) -> (i32, i32) {
    %c0_i32 = arith.constant 0 : i32
    %c0_i32_0 = arith.constant 0 : i32
    return %arg0, %c0_i32 : i32, i32
  }
}

</mosaic_0001>

<llo_original>
// kernel: tpu_custom_call.1
$region0: #{tpu_custom_call.1}
  #allocation0 [shape = 'u32[]', space=smem, size = 0x4, offset = 0x4, fixed_abs, tag = 'smem constant byte address 0x4 - core index']
  #allocation1 [shape = 'u32[72,128]{1,0:T(1,128)}', space=vmem, size = 0x9000, scoped, tag = 'internal scratch']
  %s0 = inlined_call_operand.hbm [shape: f32[2], index: 0, kind: input, shape index: {}]
  %s1 = inlined_call_operand.hbm [shape: f32[1,1024], index: 1, kind: input, shape index: {}]
  %s2 = inlined_call_operand.hbm [shape: f32[1,1024], index: 2, kind: output, shape index: {}]
  %s3 = sld [smem:[#allocation0]]
  $region26: #{tpu_custom_call.1} parent=0
    _
  %s5 = ssub.s32 1, %s3
  %s6 = scalar_select 0, %s5, %s3
  $region1: #{tpu_custom_call.1} parent=0
    #allocation2 [shape = 'u8[512]{0}', space=smem, size = 0x200, scoped, tag = 'input window, operand 0, single buffered']
    #allocation3 [shape = 's32[1]{0}', space=sflag, size = 0x4, scoped, tag = 'scoped memory for tpu_custom_call.1']
    #allocation4 [shape = 's32[1]{0}', space=sflag, size = 0x4, scoped, tag = 'scoped memory for tpu_custom_call.1']
    #allocation5 [shape = 's32[1]{0}', space=sflag, size = 0x4, scoped, tag = 'scoped memory for tpu_custom_call.1']
    #allocation6 [shape = 'u8[4096]{0}', space=vmem, size = 0x1000, scoped, tag = 'input window, operand 1, single buffered']
    #allocation7 [shape = 'u8[4096]{0}', space=vmem, size = 0x1000, scoped, tag = 'output window, operand 0, single buffered']
    %7 = vsyncpa [#allocation5], 0
    %8 = vsyncpa [#allocation3], 0
    %9 = vsyncpa [#allocation4], 0
    // Predicated region
    $region2: #{tpu_custom_call.1} parent=1 // pred_check
      _
    $region3: #{tpu_custom_call.1} parent=1 // pred_check_branch
      %11 = sbr.rel (0) target = $region5
    $region4: #{tpu_custom_call.1} parent=1 // pred_region
      %13 = vsyncadd [#allocation5], 0
      %s15 = sshll.u32 %s0, 4
      %s16 = int_to_ptr.hbm [resolvable:$true] %s15
      %18 = dma.hbm_to_smem %s16, 16, [#allocation2], [#allocation5]
    $region5: #{tpu_custom_call.1} parent=1 // pred_fallthru
      _
    // Predicated region
    $region6: #{tpu_custom_call.1} parent=1 // pred_check
      _
    $region7: #{tpu_custom_call.1} parent=1 // pred_check_branch
      %20 = sbr.rel (0) target = $region9
    $region8: #{tpu_custom_call.1} parent=1 // pred_region
      %22 = vsyncadd [#allocation3], 0
      %s24 = sshll.u32 %s1, 4
      %s25 = int_to_ptr.hbm [resolvable:$true] %s24
      %s26 = sshll.u32 [#allocation6], 4
      %s27 = int_to_ptr.vmem [resolvable:$true] %s26
      %29 = dma.hbm_to_vmem [thread:$0]  %s25, 128, %s27, [#allocation3]
    $region9: #{tpu_custom_call.1} parent=1 // pred_fallthru
      _
    // Predicated region
    $region10: #{tpu_custom_call.1} parent=1 // pred_check
      _
    $region11: #{tpu_custom_call.1} parent=1 // pred_check_branch
      %31 = sbr.rel (0) target = $region13
    $region12: #{tpu_custom_call.1} parent=1 // pred_region
      %33 = dma.done [#allocation5], 16
    $region13: #{tpu_custom_call.1} parent=1 // pred_fallthru
      _
    // Predicated region
    $region14: #{tpu_custom_call.1} parent=1 // pred_check
      _
    $region15: #{tpu_custom_call.1} parent=1 // pred_check_branch
      %35 = sbr.rel (0) target = $region17
    $region16: #{tpu_custom_call.1} parent=1 // pred_region
      %37 = dma.done [#allocation3], 128
    $region17: #{tpu_custom_call.1} parent=1 // pred_fallthru
      _
    %38 = sfence
    %s39 = sld [smem:[#allocation2]]
    %s40 = sld [smem:[#allocation2 + $0x1]]
    %v41 = vld [vmem:[#allocation6] sm:$0xff]
    %v42 = vstv %s39
    %v43 = vmul.f32 %v41, %v42
    %v44 = vstv %s40
    %v45 = vadd.f32 %v43, %v44
    %v46 = vtanh.pop %v45
    %v47 = vmul.f32 %v46, 0.5
    %v48 = vadd.f32 %v47, 0.5
    %49 = vst [vmem:[#allocation7] sm:$0xff] %v48
    // Predicated region
    $region18: #{tpu_custom_call.1} parent=1 // pred_check
      _
    $region19: #{tpu_custom_call.1} parent=1 // pred_check_branch
      %51 = sbr.rel (0) target = $region21
    $region20: #{tpu_custom_call.1} parent=1 // pred_region
      %53 = vsyncadd [#allocation4], 0
      %s55 = sshll.u32 [#allocation7], 4
      %s56 = int_to_ptr.vmem [resolvable:$true] %s55
      %s57 = sshll.u32 %s2, 4
      %s58 = int_to_ptr.hbm [resolvable:$true] %s57
      %60 = dma.vmem_to_hbm [thread:$0]  %s56, 128, %s58, [#allocation4]
    $region21: #{tpu_custom_call.1} parent=1 // pred_fallthru
      _
    // Predicated region
    $region22: #{tpu_custom_call.1} parent=1 // pred_check
      _
    $region23: #{tpu_custom_call.1} parent=1 // pred_check_branch
      %62 = sbr.rel (0) target = $region25
    $region24: #{tpu_custom_call.1} parent=1 // pred_region
      %64 = dma.done [#allocation4], 128
    $region25: #{tpu_custom_call.1} parent=1 // pred_fallthru
      _
    %65 = vsyncpa [#allocation3], 1
    %66 = vsyncpa [#allocation4], 1
    %67 = vsyncpa [#allocation5], 1

</llo_original>
